<compile_context>
chip_gen: v7x
topology: tpu7x:2x2x1
jax: 0.10.0
libtpu: 0.0.40
codegen_flags: <defaults>
</compile_context>

<pallas_src>
import jax
import jax.numpy as jnp
from jax.experimental import pallas as pl
from jax.experimental.pallas import tpu as pltpu

_BORDER = 10
_BG_VALUE = 142800.0


def _make_msat_kernel(ms: float, H: int, W: int, tile_r: int):
    """Kernel emitting one lane-dense full-tile store per block.

    rho_slab_ref: (tile_r, W) block of rho pre-placed at offset (10, 10) in an
                  (H, W) slab (zeros outside the interior).
    out_ref:      (tile_r, W) block of Msat.
    """
    def kernel(rho_slab_ref, out_ref):
        r0 = pl.program_id(0) * tile_r
        rows = jax.lax.broadcasted_iota(jnp.int32, (tile_r, W), 0) + r0
        cols = jax.lax.broadcasted_iota(jnp.int32, (tile_r, W), 1)
        interior = ((rows >= _BORDER) & (rows < H - _BORDER) &
                    (cols >= _BORDER) & (cols < W - _BORDER))
        vals = rho_slab_ref[...] * ms          # VPU multiply, Ms baked as const
        out_ref[...] = jnp.where(
            interior, vals, jnp.asarray(_BG_VALUE, out_ref.dtype)
        ).astype(out_ref.dtype)
    return kernel


def _pick_row_tile(H: int, W: int, dtype) -> int:
    """Largest row tile that (a) divides H, (b) is a multiple of 8, and
    (c) keeps double-buffered in+out blocks well under the scoped VMEM limit
    on all generations (v7x included).  Falls back to the full array (always
    a legal block shape)."""
    itemsize = jnp.dtype(dtype).itemsize
    budget = 8 << 20  # ~8 MiB: 2 arrays x 2 pipeline buffers x block bytes
    if 4 * H * W * itemsize <= budget or H % 8 != 0:
        return H
    for cand in (1024, 512, 256, 128, 64, 32, 16, 8):
        if H % cand == 0 and 4 * cand * W * itemsize <= budget:
            return cand
    return H


def wave_geometry_ms_forward(rho: jax.Array, Ms: float, dim) -> jax.Array:
    """JAX wrapper reproducing WaveGeometryMs.forward()."""
    H, W = dim
    assert H > 2 * _BORDER and W > 2 * _BORDER, "dim must exceed 20 in each axis"
    assert rho.shape == (H - 2 * _BORDER, W - 2 * _BORDER)

    # Pre-place rho in a lane-aligned (H, W) slab (fuses into the producer in
    # XLA); removes all cross-lane movement / masked stores from the kernel.
    rho_slab = jnp.pad(rho, ((_BORDER, _BORDER), (_BORDER, _BORDER)))

    tile_r = _pick_row_tile(H, W, rho.dtype)
    grid = (H // tile_r,)
    kernel = _make_msat_kernel(float(Ms), H, W, tile_r)

    return pl.pallas_call(
        kernel,
        out_shape=jax.ShapeDtypeStruct((H, W), rho.dtype),
        grid_spec=pltpu.PrefetchScalarGridSpec(
            num_scalar_prefetch=0,
            grid=grid,
            in_specs=[pl.BlockSpec((tile_r, W), lambda i: (i, 0))],
            out_specs=pl.BlockSpec((tile_r, W), lambda i: (i, 0)),
        ),
        compiler_params=pltpu.CompilerParams(
            dimension_semantics=("parallel",)),
    )(rho_slab)


def _reference_forward(rho: jax.Array, Ms: float, dim) -> jax.Array:
    """Pure-JAX reference mirroring the PyTorch code."""
    H, W = dim
    rho_pad = jnp.full((H, W), _BG_VALUE, dtype=rho.dtype)
    rho_pad = rho_pad.at[_BORDER:H - _BORDER, _BORDER:W - _BORDER].set(rho * Ms)
    return rho_pad


if __name__ == "__main__":
    # Small shapes consistent with the module: dim=(H, W), rho=(H-20, W-20).
    dim = (36, 44)
    Ms = 140e3        # saturation magnetisation scalar buffer
    B0 = 60e-3        # bias field buffer (not used by forward's return value)

    key = jax.random.PRNGKey(0)
    # nn.Parameter rho is initialised to ones in __init__; use deterministic
    # random values here to exercise the multiply (same shape/dtype).
    rho = jax.random.uniform(key, (dim[0] - 20, dim[1] - 20), dtype=jnp.float32)

    out = wave_geometry_ms_forward(rho, Ms, dim)
    out = jax.block_until_ready(out)

    ref = _reference_forward(rho, Ms, dim)
    assert out.shape == dim and out.dtype == jnp.float32
    assert jnp.allclose(out, ref, rtol=1e-6, atol=1e-2), "mismatch vs reference"

    print("KERNEL_OK")
</pallas_src>

<mosaic_0001>
module attributes {stable_mosaic.version = 11 : i64} {
  func.func @kernel(%arg0: i32, %arg1: memref<36x44xf32, #tpu.memory_space<vmem>>, %arg2: memref<36x44xf32, #tpu.memory_space<vmem>>) attributes {dimension_semantics = [#tpu.dimension_semantics<parallel>], iteration_bounds = array<i64: 1>, scalar_prefetch = 0 : i64, scratch_operands = 0 : i64, tpu.core_type = #tpu.core_type<tc>, window_params = [{transform_indices = @transform_0, window_bounds = array<i64: 36, 44>}, {transform_indices = @transform_1, window_bounds = array<i64: 36, 44>}]} {
    %c36_i32 = arith.constant 36 : i32
    %0 = arith.muli %arg0, %c36_i32 : i32
    %1 = tpu.iota {dimensions = array<i32: 0>} : vector<36x44xi32>
    %2 = vector.broadcast %0 : i32 to vector<36x44xi32>
    %3 = arith.addi %1, %2 : vector<36x44xi32>
    %4 = tpu.iota {dimensions = array<i32: 1>} : vector<36x44xi32>
    %c10_i32 = arith.constant 10 : i32
    %5 = vector.broadcast %c10_i32 : i32 to vector<36x44xi32>
    %6 = arith.cmpi sge, %3, %5 : vector<36x44xi32>
    %c26_i32 = arith.constant 26 : i32
    %7 = vector.broadcast %c26_i32 : i32 to vector<36x44xi32>
    %8 = arith.cmpi slt, %3, %7 : vector<36x44xi32>
    %9 = arith.andi %6, %8 : vector<36x44xi1>
    %c10_i32_0 = arith.constant 10 : i32
    %10 = vector.broadcast %c10_i32_0 : i32 to vector<36x44xi32>
    %11 = arith.cmpi sge, %4, %10 : vector<36x44xi32>
    %12 = arith.andi %9, %11 : vector<36x44xi1>
    %c34_i32 = arith.constant 34 : i32
    %13 = vector.broadcast %c34_i32 : i32 to vector<36x44xi32>
    %14 = arith.cmpi slt, %4, %13 : vector<36x44xi32>
    %15 = arith.andi %12, %14 : vector<36x44xi1>
    %c0 = arith.constant 0 : index
    %c0_1 = arith.constant 0 : index
    %16 = vector.load %arg1[%c0, %c0_1] : memref<36x44xf32, #tpu.memory_space<vmem>>, vector<36x44xf32>
    %cst = arith.constant 1.400000e+05 : f32
    %17 = vector.broadcast %cst : f32 to vector<36x44xf32>
    %18 = arith.mulf %16, %17 : vector<36x44xf32>
    %cst_2 = arith.constant 1.428000e+05 : f32
    %19 = vector.broadcast %cst_2 : f32 to vector<36x44xf32>
    %20 = arith.select %15, %18, %19 : vector<36x44xi1>, vector<36x44xf32>
    %c0_3 = arith.constant 0 : index
    %c0_4 = arith.constant 0 : index
    %21 = vector.load %arg2[%c0_3, %c0_4] : memref<36x44xf32, #tpu.memory_space<vmem>>, vector<36x44xf32>
    tpu.vector_store %arg2[%c0_3, %c0_4], %20 {strides = array<i32>} : memref<36x44xf32, #tpu.memory_space<vmem>>, vector<36x44xf32>,
    return
  }
  func.func @transform_0(%arg0: i32) -> (i32, i32) {
    %c0_i32 = arith.constant 0 : i32
    %c0_i32_0 = arith.constant 0 : i32
    return %arg0, %c0_i32 : i32, i32
  }
  func.func @transform_1(%arg0: i32) -> (i32, i32) {
    %c0_i32 = arith.constant 0 : i32
    %c0_i32_0 = arith.constant 0 : i32
    return %arg0, %c0_i32 : i32, i32
  }
}

</mosaic_0001>

<llo_original>
// kernel: tpu_custom_call.1
$region0: #{tpu_custom_call.1}
  #allocation0 [shape = 'u32[]', space=smem, size = 0x4, offset = 0x4, fixed_abs, tag = 'smem constant byte address 0x4 - core index']
  #allocation1 [shape = 'u32[144,128]{1,0:T(1,128)}', space=vmem, size = 0x12000, scoped, tag = 'internal scratch']
  %s0 = inlined_call_operand.hbm [shape: f32[36,44], index: 0, kind: input, shape index: {}]
  %s1 = inlined_call_operand.hbm [shape: f32[36,44], index: 1, kind: output, shape index: {}]
  %s2 = sld [smem:[#allocation0]]
  $region18: #{tpu_custom_call.1} parent=0
    _
  %s4 = ssub.s32 1, %s2
  %s5 = scalar_select 0, %s4, %s2
  $region1: #{tpu_custom_call.1} parent=0
    #allocation2 [shape = 'u8[20480]{0}', space=vmem, size = 0x5000, scoped, tag = 'input window, operand 0, single buffered']
    #allocation3 [shape = 's32[1]{0}', space=sflag, size = 0x4, scoped, tag = 'scoped memory for tpu_custom_call.1']
    #allocation4 [shape = 's32[1]{0}', space=sflag, size = 0x4, scoped, tag = 'scoped memory for tpu_custom_call.1']
    #allocation5 [shape = 'u8[20480]{0}', space=vmem, size = 0x5000, scoped, tag = 'output window, operand 0, single buffered']
    %6 = vsyncpa [#allocation3], 0
    %7 = vsyncpa [#allocation4], 0
    // Predicated region
    $region2: #{tpu_custom_call.1} parent=1 // pred_check
      _
    $region3: #{tpu_custom_call.1} parent=1 // pred_check_branch
      %9 = sbr.rel (0) target = $region5
    $region4: #{tpu_custom_call.1} parent=1 // pred_region
      %s11 = ssub.s32 640, 640
      %12 = vsyncadd [#allocation3], %s11
      %s13 = sshll.u32 [#allocation2], 4
      %s14 = int_to_ptr.vmem [resolvable:$true] %s13
      %19 = dma.hbm_to_vmem [thread:$0]  %s0, 640, %s14, [#allocation3], 128, 128, 8
    $region5: #{tpu_custom_call.1} parent=1 // pred_fallthru
      _
    // Predicated region
    $region6: #{tpu_custom_call.1} parent=1 // pred_check
      _
    $region7: #{tpu_custom_call.1} parent=1 // pred_check_branch
      %21 = sbr.rel (0) target = $region9
    $region8: #{tpu_custom_call.1} parent=1 // pred_region
      %22 = dma.done [#allocation3], 640
    $region9: #{tpu_custom_call.1} parent=1 // pred_fallthru
      _
    %s23 = smul.u32 0, 36
    %v24 = vlaneseq
    %v25 = vshrl.u32 %v24, 7
    %v26 = vadd.s32 %v25, 8
    %v27 = vadd.s32 %v25, 16
    %v28 = vadd.s32 %v25, 24
    %v29 = vadd.s32 %v25, 32
    %v30 = vstv %s23
    %v31 = vadd.s32 %v25, %v30
    %v32 = vadd.s32 %v26, %v30
    %v33 = vadd.s32 %v27, %v30
    %v34 = vadd.s32 %v28, %v30
    %v35 = vadd.s32 %v29, %v30
    %v36 = vlaneseq
    %v37 = vand.u32 %v36, 127
    %vm38 = vcmp.ge.s32.totalorder %v31, 10
    %vm39 = vcmp.ge.s32.totalorder %v32, 10
    %vm40 = vcmp.ge.s32.totalorder %v33, 10
    %vm41 = vcmp.ge.s32.totalorder %v34, 10
    %vm42 = vcmp.ge.s32.totalorder %v35, 10
    %vm43 = vcmp.lt.s32.totalorder %v31, 26
    %vm44 = vcmp.lt.s32.totalorder %v32, 26
    %vm45 = vcmp.lt.s32.totalorder %v33, 26
    %vm46 = vcmp.lt.s32.totalorder %v34, 26
    %vm47 = vcmp.lt.s32.totalorder %v35, 26
    %vm48 = vmand %vm38, %vm43
    %vm49 = vmand %vm39, %vm44
    %vm50 = vmand %vm40, %vm45
    %vm51 = vmand %vm41, %vm46
    %vm52 = vmand %vm42, %vm47
    %vm53 = vcmp.ge.s32.totalorder %v37, 10
    %vm54 = vmand %vm48, %vm53
    %vm55 = vmand %vm49, %vm53
    %vm56 = vmand %vm50, %vm53
    %vm57 = vmand %vm51, %vm53
    %vm58 = vmand %vm52, %vm53
    %vm59 = vcmp.lt.s32.totalorder %v37, 34
    %vm60 = vmand %vm54, %vm59
    %vm61 = vmand %vm55, %vm59
    %vm62 = vmand %vm56, %vm59
    %vm63 = vmand %vm57, %vm59
    %vm64 = vmand %vm58, %vm59
    %v65 = vld [vmem:[#allocation2] sm:$0xff]
    %v66 = vld [vmem:[#allocation2 + $0x8] sm:$0xff]
    %v67 = vld [vmem:[#allocation2 + $0x10] sm:$0xff]
    %v68 = vld [vmem:[#allocation2 + $0x18] sm:$0xff]
    %v69 = vld [vmem:[#allocation2 + $0x20] sm:$0xf]
    %v70 = vmul.f32 %v65, 140000.0
    %v71 = vmul.f32 %v66, 140000.0
    %v72 = vmul.f32 %v67, 140000.0
    %v73 = vmul.f32 %v68, 140000.0
    %v74 = vmul.f32 %v69, 140000.0
    %v75 = vsel %vm60, %v70, 142800.0
    %v76 = vsel %vm61, %v71, 142800.0
    %v77 = vsel %vm62, %v72, 142800.0
    %v78 = vsel %vm63, %v73, 142800.0
    %v79 = vsel %vm64, %v74, 142800.0
    %vm80 = vcmask 359424
    %81 = vst.msk [vmem:[#allocation5] sm:$0xff] %vm80, %v75
    %82 = vst.msk [vmem:[#allocation5 + $0x8] sm:$0xff] %vm80, %v76
    %83 = vst.msk [vmem:[#allocation5 + $0x10] sm:$0xff] %vm80, %v77
    %84 = vst.msk [vmem:[#allocation5 + $0x18] sm:$0xff] %vm80, %v78
    %vm85 = vcmask 355328
    %86 = vst.msk [vmem:[#allocation5 + $0x20] sm:$0xf] %vm85, %v79
    // Predicated region
    $region10: #{tpu_custom_call.1} parent=1 // pred_check
      _
    $region11: #{tpu_custom_call.1} parent=1 // pred_check_branch
      %88 = sbr.rel (0) target = $region13
    $region12: #{tpu_custom_call.1} parent=1 // pred_region
      %s90 = ssub.s32 640, 640
      %91 = vsyncadd [#allocation4], %s90
      %s92 = sshll.u32 [#allocation5], 4
      %s93 = int_to_ptr.vmem [resolvable:$true] %s92
      %98 = dma.vmem_to_hbm [thread:$0]  %s93, 640, %s1, [#allocation4], 128, 128, 8
    $region13: #{tpu_custom_call.1} parent=1 // pred_fallthru
      _
    // Predicated region
    $region14: #{tpu_custom_call.1} parent=1 // pred_check
      _
    $region15: #{tpu_custom_call.1} parent=1 // pred_check_branch
      %100 = sbr.rel (0) target = $region17
    $region16: #{tpu_custom_call.1} parent=1 // pred_region
      %101 = dma.done [#allocation4], 640
    $region17: #{tpu_custom_call.1} parent=1 // pred_fallthru
      _
    %102 = vsyncpa [#allocation3], 1
    %103 = vsyncpa [#allocation4], 1

</llo_original>
